<compile_context>
chip_gen: v7x
topology: tpu7x:2x2x1
jax: 0.10.0
libtpu: 0.0.40
codegen_flags: <defaults>
</compile_context>

<pallas_src>
import numpy as np
import jax
import jax.numpy as jnp
from jax.experimental import pallas as pl
from jax.experimental.pallas import tpu as pltpu


def create_high_pass_kernel(kernel_size: int, sigma: float, in_channels: int) -> np.ndarray:
    """Exact replication of GaussianFilter.create_high_pass_kernel (numpy, deterministic)."""
    kernel = np.zeros((kernel_size, kernel_size))
    pad = kernel_size // 2
    for x in range(-pad, -pad + kernel_size):
        for y in range(-pad, -pad + kernel_size):
            kernel[y + pad, x + pad] = np.exp(-(x ** 2 + y ** 2) / (2 * sigma ** 2))
    kernel /= sigma ** 2 * np.pi * 2
    kernel /= kernel.sum()
    identity_kernel = np.zeros((kernel_size, kernel_size))
    identity_kernel[pad, pad] = 1
    high_pass_kernel = identity_kernel - kernel
    high_pass_kernel /= -high_pass_kernel[pad, pad]
    # (C, 1, K, K), same weights repeated per channel (like .repeat(C,1,1,1))
    return np.broadcast_to(
        high_pass_kernel.astype(np.float32)[None, None], (in_channels, 1, kernel_size, kernel_size)
    ).copy()


def gaussian_filter_forward(x: jax.Array, weights: jax.Array, kernel_size: int) -> jax.Array:
    """Depthwise conv2d(x, weights, padding=K//2, groups=C) via a Pallas TPU kernel.

    x:       (N, C, H, W) float
    weights: (C, 1, K, K) float
    """
    N, C, H, W = x.shape
    K = kernel_size
    # F.conv2d with padding=K//2 only preserves HxW for odd K.
    assert K % 2 == 1, "gaussian_filter_forward supports odd kernel_size only"
    p = K // 2
    Hp, Wp = H + 2 * p, W + 2 * p
    P = N * C
    KK = K * K

    # Plane-major views (metadata-only reshapes; no extra HBM pass for x).
    x_planes = x.reshape(P, H, W)
    w_flat = weights.astype(jnp.float32).reshape(C, KK)
    w_planes = jnp.broadcast_to(w_flat[None, :, None, :], (N, C, 1, KK)).reshape(P, 1, KK)

    # Plane-batch size: as many planes as fit a conservative VMEM budget
    # (double-buffered in+out blocks + halo scratch), but keep >= 2 grid steps
    # when possible so v7x can shard the "parallel" axis across its 2 TCs.
    bytes_per_plane = 4 * (4 * H * W + Hp * Wp)  # 2x in + 2x out (dbuf) + scratch
    budget = 20 * 1024 * 1024
    TB = max(1, min(P, budget // max(bytes_per_plane, 1)))
    if P >= 2:
        TB = min(TB, pl.cdiv(P, 2))
    TB = int(TB)
    grid = (pl.cdiv(P, TB),)
    # TODO(synk): for single planes exceeding the VMEM budget (e.g. 2k x 2k f32 on
    # v7x's 64 MiB VMEM), add H-tiling with a halo instead of full-plane blocks.

    block_bytes = TB * bytes_per_plane + TB * KK * 4
    vmem_limit = int(min(64 * 1024 * 1024, max(32 * 1024 * 1024, 2 * block_bytes)))

    def kernel_body(w_ref, x_ref, o_ref, xp_ref):
        # w_ref : VMEM (TB, 1, K*K)   per-plane taps
        # x_ref : VMEM (TB, H, W)     un-padded planes
        # o_ref : VMEM (TB, H, W)
        # xp_ref: VMEM (TB, Hp, Wp)   zero-halo staging scratch (VMEM-only traffic)
        x32 = x_ref[...].astype(jnp.float32)

        if p > 0:
            # Zero only the halo border (top/bottom rows, left/right columns);
            # the interior is fully overwritten below, so a full-scratch clear
            # would be a redundant VMEM store pass. Border is re-written every
            # step -> no cross-step state, safe under megacore sharding.
            zrow = jnp.zeros((TB, p, Wp), jnp.float32)
            xp_ref[:, 0:p, :] = zrow
            xp_ref[:, p + H:Hp, :] = zrow
            zcol = jnp.zeros((TB, H, p), jnp.float32)
            xp_ref[:, p:p + H, 0:p] = zcol
            xp_ref[:, p:p + H, p + W:Wp] = zcol

        xp_ref[:, p:p + H, p:p + W] = x32

        # Unrolled KxK stencil on the VPU: per-plane scalar tap * shifted slice.
        acc = None
        for ky in range(K):
            for kx in range(K):
                t = ky * K + kx
                w_t = w_ref[:, :, t:t + 1]                       # (TB, 1, 1)
                contrib = w_t * xp_ref[:, ky:ky + H, kx:kx + W]  # (TB, H, W)
                acc = contrib if acc is None else acc + contrib
        o_ref[...] = acc.astype(o_ref.dtype)

    out = pl.pallas_call(
        kernel_body,
        out_shape=jax.ShapeDtypeStruct((P, H, W), x.dtype),
        grid=grid,
        in_specs=[
            pl.BlockSpec((TB, 1, KK), lambda i: (i, 0, 0)),   # per-plane weights
            pl.BlockSpec((TB, H, W), lambda i: (i, 0, 0)),    # batched planes
        ],
        out_specs=pl.BlockSpec((TB, H, W), lambda i: (i, 0, 0)),
        scratch_shapes=[pltpu.VMEM((TB, Hp, Wp), jnp.float32)],
        compiler_params=pltpu.CompilerParams(
            dimension_semantics=("parallel",),
            vmem_limit_bytes=vmem_limit),
    )(w_planes, x_planes)

    return out.reshape(N, C, H, W)


if __name__ == "__main__":
    # Small deterministic example consistent with the module's forward.
    kernel_size = 3
    sigma = 1.0
    in_channels = 4
    N, C, H, W = 2, in_channels, 16, 16

    key = jax.random.PRNGKey(0)
    x = jax.random.normal(key, (N, C, H, W), dtype=jnp.float32)

    w_np = create_high_pass_kernel(kernel_size, sigma, in_channels)  # (C,1,K,K)
    weights = jnp.asarray(w_np)

    out = gaussian_filter_forward(x, weights, kernel_size)
    out = jax.block_until_ready(out)

    # Reference: grouped conv via XLA, for correctness validation only.
    p = kernel_size // 2
    ref = jax.lax.conv_general_dilated(
        x, weights, window_strides=(1, 1), padding=[(p, p), (p, p)],
        dimension_numbers=("NCHW", "OIHW", "NCHW"), feature_group_count=C)
    ref = jax.block_until_ready(ref)

    assert out.shape == (N, C, H, W) and out.dtype == jnp.float32
    np.testing.assert_allclose(np.asarray(out), np.asarray(ref), rtol=1e-5, atol=1e-5)
    print("KERNEL_OK")
</pallas_src>

<mosaic_0001>
module attributes {stable_mosaic.version = 11 : i64} {
  func.func @kernel_body(%arg0: i32, %arg1: memref<4x1x9xf32, #tpu.memory_space<vmem>>, %arg2: memref<4x16x16xf32, #tpu.memory_space<vmem>>, %arg3: memref<4x16x16xf32, #tpu.memory_space<vmem>>, %arg4: memref<4x18x18xf32, #tpu.memory_space<vmem>>) attributes {dimension_semantics = [#tpu.dimension_semantics<parallel>], iteration_bounds = array<i64: 2>, scalar_prefetch = 0 : i64, scratch_operands = 1 : i64, tpu.core_type = #tpu.core_type<tc>, window_params = [{transform_indices = @transform_0, window_bounds = array<i64: 4, 1, 9>}, {transform_indices = @transform_1, window_bounds = array<i64: 4, 16, 16>}, {transform_indices = @transform_2, window_bounds = array<i64: 4, 16, 16>}]} {
    %c0 = arith.constant 0 : index
    %c0_0 = arith.constant 0 : index
    %c0_1 = arith.constant 0 : index
    %0 = vector.load %arg2[%c0, %c0_0, %c0_1] : memref<4x16x16xf32, #tpu.memory_space<vmem>>, vector<4x16x16xf32>
    %cst = arith.constant 0.000000e+00 : f32
    %1 = vector.broadcast %cst : f32 to vector<4x1x18xf32>
    %c0_2 = arith.constant 0 : index
    %c0_3 = arith.constant 0 : index
    %c0_4 = arith.constant 0 : index
    %2 = vector.load %arg4[%c0_2, %c0_3, %c0_4] : memref<4x18x18xf32, #tpu.memory_space<vmem>>, vector<4x1x18xf32>
    tpu.vector_store %arg4[%c0_2, %c0_3, %c0_4], %1 {strides = array<i32>} : memref<4x18x18xf32, #tpu.memory_space<vmem>>, vector<4x1x18xf32>,
    %c0_5 = arith.constant 0 : index
    %c17 = arith.constant 17 : index
    %c0_6 = arith.constant 0 : index
    %3 = vector.load %arg4[%c0_5, %c17, %c0_6] : memref<4x18x18xf32, #tpu.memory_space<vmem>>, vector<4x1x18xf32>
    tpu.vector_store %arg4[%c0_5, %c17, %c0_6], %1 {strides = array<i32>} : memref<4x18x18xf32, #tpu.memory_space<vmem>>, vector<4x1x18xf32>,
    %cst_7 = arith.constant 0.000000e+00 : f32
    %4 = vector.broadcast %cst_7 : f32 to vector<4x16x1xf32>
    %c0_8 = arith.constant 0 : index
    %c1 = arith.constant 1 : index
    %c0_9 = arith.constant 0 : index
    %5 = vector.load %arg4[%c0_8, %c1, %c0_9] : memref<4x18x18xf32, #tpu.memory_space<vmem>>, vector<4x16x1xf32>
    tpu.vector_store %arg4[%c0_8, %c1, %c0_9], %4 {strides = array<i32>} : memref<4x18x18xf32, #tpu.memory_space<vmem>>, vector<4x16x1xf32>,
    %c0_10 = arith.constant 0 : index
    %c1_11 = arith.constant 1 : index
    %c17_12 = arith.constant 17 : index
    %6 = vector.load %arg4[%c0_10, %c1_11, %c17_12] : memref<4x18x18xf32, #tpu.memory_space<vmem>>, vector<4x16x1xf32>
    tpu.vector_store %arg4[%c0_10, %c1_11, %c17_12], %4 {strides = array<i32>} : memref<4x18x18xf32, #tpu.memory_space<vmem>>, vector<4x16x1xf32>,
    %c0_13 = arith.constant 0 : index
    %c1_14 = arith.constant 1 : index
    %c1_15 = arith.constant 1 : index
    %7 = vector.load %arg4[%c0_13, %c1_14, %c1_15] : memref<4x18x18xf32, #tpu.memory_space<vmem>>, vector<4x16x16xf32>
    tpu.vector_store %arg4[%c0_13, %c1_14, %c1_15], %0 {strides = array<i32>} : memref<4x18x18xf32, #tpu.memory_space<vmem>>, vector<4x16x16xf32>,
    %c0_16 = arith.constant 0 : index
    %c0_17 = arith.constant 0 : index
    %c0_18 = arith.constant 0 : index
    %8 = vector.load %arg1[%c0_16, %c0_17, %c0_18] : memref<4x1x9xf32, #tpu.memory_space<vmem>>, vector<4x1x1xf32>
    %c0_19 = arith.constant 0 : index
    %c0_20 = arith.constant 0 : index
    %c0_21 = arith.constant 0 : index
    %9 = vector.load %arg4[%c0_19, %c0_20, %c0_21] : memref<4x18x18xf32, #tpu.memory_space<vmem>>, vector<4x16x16xf32>
    %10 = vector.broadcast %8 : vector<4x1x1xf32> to vector<4x16x16xf32>
    %11 = arith.mulf %10, %9 : vector<4x16x16xf32>
    %c0_22 = arith.constant 0 : index
    %c0_23 = arith.constant 0 : index
    %c1_24 = arith.constant 1 : index
    %12 = vector.load %arg1[%c0_22, %c0_23, %c1_24] : memref<4x1x9xf32, #tpu.memory_space<vmem>>, vector<4x1x1xf32>
    %c0_25 = arith.constant 0 : index
    %c0_26 = arith.constant 0 : index
    %c1_27 = arith.constant 1 : index
    %13 = vector.load %arg4[%c0_25, %c0_26, %c1_27] : memref<4x18x18xf32, #tpu.memory_space<vmem>>, vector<4x16x16xf32>
    %14 = vector.broadcast %12 : vector<4x1x1xf32> to vector<4x16x16xf32>
    %15 = arith.mulf %14, %13 : vector<4x16x16xf32>
    %16 = arith.addf %11, %15 : vector<4x16x16xf32>
    %c0_28 = arith.constant 0 : index
    %c0_29 = arith.constant 0 : index
    %c2 = arith.constant 2 : index
    %17 = vector.load %arg1[%c0_28, %c0_29, %c2] : memref<4x1x9xf32, #tpu.memory_space<vmem>>, vector<4x1x1xf32>
    %c0_30 = arith.constant 0 : index
    %c0_31 = arith.constant 0 : index
    %c2_32 = arith.constant 2 : index
    %18 = vector.load %arg4[%c0_30, %c0_31, %c2_32] : memref<4x18x18xf32, #tpu.memory_space<vmem>>, vector<4x16x16xf32>
    %19 = vector.broadcast %17 : vector<4x1x1xf32> to vector<4x16x16xf32>
    %20 = arith.mulf %19, %18 : vector<4x16x16xf32>
    %21 = arith.addf %16, %20 : vector<4x16x16xf32>
    %c0_33 = arith.constant 0 : index
    %c0_34 = arith.constant 0 : index
    %c3 = arith.constant 3 : index
    %22 = vector.load %arg1[%c0_33, %c0_34, %c3] : memref<4x1x9xf32, #tpu.memory_space<vmem>>, vector<4x1x1xf32>
    %c0_35 = arith.constant 0 : index
    %c1_36 = arith.constant 1 : index
    %c0_37 = arith.constant 0 : index
    %23 = vector.load %arg4[%c0_35, %c1_36, %c0_37] : memref<4x18x18xf32, #tpu.memory_space<vmem>>, vector<4x16x16xf32>
    %24 = vector.broadcast %22 : vector<4x1x1xf32> to vector<4x16x16xf32>
    %25 = arith.mulf %24, %23 : vector<4x16x16xf32>
    %26 = arith.addf %21, %25 : vector<4x16x16xf32>
    %c0_38 = arith.constant 0 : index
    %c0_39 = arith.constant 0 : index
    %c4 = arith.constant 4 : index
    %27 = vector.load %arg1[%c0_38, %c0_39, %c4] : memref<4x1x9xf32, #tpu.memory_space<vmem>>, vector<4x1x1xf32>
    %c0_40 = arith.constant 0 : index
    %c1_41 = arith.constant 1 : index
    %c1_42 = arith.constant 1 : index
    %28 = vector.load %arg4[%c0_40, %c1_41, %c1_42] : memref<4x18x18xf32, #tpu.memory_space<vmem>>, vector<4x16x16xf32>
    %29 = vector.broadcast %27 : vector<4x1x1xf32> to vector<4x16x16xf32>
    %30 = arith.mulf %29, %28 : vector<4x16x16xf32>
    %31 = arith.addf %26, %30 : vector<4x16x16xf32>
    %c0_43 = arith.constant 0 : index
    %c0_44 = arith.constant 0 : index
    %c5 = arith.constant 5 : index
    %32 = vector.load %arg1[%c0_43, %c0_44, %c5] : memref<4x1x9xf32, #tpu.memory_space<vmem>>, vector<4x1x1xf32>
    %c0_45 = arith.constant 0 : index
    %c1_46 = arith.constant 1 : index
    %c2_47 = arith.constant 2 : index
    %33 = vector.load %arg4[%c0_45, %c1_46, %c2_47] : memref<4x18x18xf32, #tpu.memory_space<vmem>>, vector<4x16x16xf32>
    %34 = vector.broadcast %32 : vector<4x1x1xf32> to vector<4x16x16xf32>
    %35 = arith.mulf %34, %33 : vector<4x16x16xf32>
    %36 = arith.addf %31, %35 : vector<4x16x16xf32>
    %c0_48 = arith.constant 0 : index
    %c0_49 = arith.constant 0 : index
    %c6 = arith.constant 6 : index
    %37 = vector.load %arg1[%c0_48, %c0_49, %c6] : memref<4x1x9xf32, #tpu.memory_space<vmem>>, vector<4x1x1xf32>
    %c0_50 = arith.constant 0 : index
    %c2_51 = arith.constant 2 : index
    %c0_52 = arith.constant 0 : index
    %38 = vector.load %arg4[%c0_50, %c2_51, %c0_52] : memref<4x18x18xf32, #tpu.memory_space<vmem>>, vector<4x16x16xf32>
    %39 = vector.broadcast %37 : vector<4x1x1xf32> to vector<4x16x16xf32>
    %40 = arith.mulf %39, %38 : vector<4x16x16xf32>
    %41 = arith.addf %36, %40 : vector<4x16x16xf32>
    %c0_53 = arith.constant 0 : index
    %c0_54 = arith.constant 0 : index
    %c7 = arith.constant 7 : index
    %42 = vector.load %arg1[%c0_53, %c0_54, %c7] : memref<4x1x9xf32, #tpu.memory_space<vmem>>, vector<4x1x1xf32>
    %c0_55 = arith.constant 0 : index
    %c2_56 = arith.constant 2 : index
    %c1_57 = arith.constant 1 : index
    %43 = vector.load %arg4[%c0_55, %c2_56, %c1_57] : memref<4x18x18xf32, #tpu.memory_space<vmem>>, vector<4x16x16xf32>
    %44 = vector.broadcast %42 : vector<4x1x1xf32> to vector<4x16x16xf32>
    %45 = arith.mulf %44, %43 : vector<4x16x16xf32>
    %46 = arith.addf %41, %45 : vector<4x16x16xf32>
    %c0_58 = arith.constant 0 : index
    %c0_59 = arith.constant 0 : index
    %c8 = arith.constant 8 : index
    %47 = vector.load %arg1[%c0_58, %c0_59, %c8] : memref<4x1x9xf32, #tpu.memory_space<vmem>>, vector<4x1x1xf32>
    %c0_60 = arith.constant 0 : index
    %c2_61 = arith.constant 2 : index
    %c2_62 = arith.constant 2 : index
    %48 = vector.load %arg4[%c0_60, %c2_61, %c2_62] : memref<4x18x18xf32, #tpu.memory_space<vmem>>, vector<4x16x16xf32>
    %49 = vector.broadcast %47 : vector<4x1x1xf32> to vector<4x16x16xf32>
    %50 = arith.mulf %49, %48 : vector<4x16x16xf32>
    %51 = arith.addf %46, %50 : vector<4x16x16xf32>
    %c0_63 = arith.constant 0 : index
    %c0_64 = arith.constant 0 : index
    %c0_65 = arith.constant 0 : index
    %52 = vector.load %arg3[%c0_63, %c0_64, %c0_65] : memref<4x16x16xf32, #tpu.memory_space<vmem>>, vector<4x16x16xf32>
    tpu.vector_store %arg3[%c0_63, %c0_64, %c0_65], %51 {strides = array<i32>} : memref<4x16x16xf32, #tpu.memory_space<vmem>>, vector<4x16x16xf32>,
    return
  }
  func.func @transform_0(%arg0: i32) -> (i32, i32, i32) {
    %c0_i32 = arith.constant 0 : i32
    %c0_i32_0 = arith.constant 0 : i32
    %c0_i32_1 = arith.constant 0 : i32
    return %arg0, %c0_i32, %c0_i32_0 : i32, i32, i32
  }
  func.func @transform_1(%arg0: i32) -> (i32, i32, i32) {
    %c0_i32 = arith.constant 0 : i32
    %c0_i32_0 = arith.constant 0 : i32
    %c0_i32_1 = arith.constant 0 : i32
    return %arg0, %c0_i32, %c0_i32_0 : i32, i32, i32
  }
  func.func @transform_2(%arg0: i32) -> (i32, i32, i32) {
    %c0_i32 = arith.constant 0 : i32
    %c0_i32_0 = arith.constant 0 : i32
    %c0_i32_1 = arith.constant 0 : i32
    return %arg0, %c0_i32, %c0_i32_0 : i32, i32, i32
  }
}

</mosaic_0001>

<llo_original>
// kernel: tpu_custom_call.1
$region0: #{tpu_custom_call.1}
  #allocation0 [shape = 'u32[]', space=smem, size = 0x4, offset = 0x4, fixed_abs, tag = 'smem constant byte address 0x4 - core index']
  #allocation1 [shape = 'u32[144,128]{1,0:T(1,128)}', space=vmem, size = 0x12000, scoped, tag = 'internal scratch']
  #allocation2 [shape = 'f32[4,18,18]{2,1,0:T(8,128)}', space=vmem, size = 0xc000, scoped, tag = 'scratch operand']
  %s0 = inlined_call_operand.hbm [shape: f32[8,1,9], index: 0, kind: input, shape index: {}]
  %s1 = inlined_call_operand.hbm [shape: f32[8,16,16], index: 1, kind: input, shape index: {}]
  %s2 = inlined_call_operand.hbm [shape: f32[8,16,16], index: 2, kind: output, shape index: {}]
  %s3 = sld [smem:[#allocation0]]
  $region49: #{tpu_custom_call.1} parent=0
    _
  %s5 = ssub.s32 1, %s3
  %s6 = scalar_select 0, %s5, %s3
  $region1: #{tpu_custom_call.1} parent=0
    #allocation3 [shape = 'u8[4096]{0}', space=vmem, size = 0x1000, scoped, tag = 'input window, operand 0']
    #allocation4 [shape = 's32[2]{0}', space=sflag, size = 0x8, scoped, tag = 'scoped memory for tpu_custom_call.1']
    #allocation5 [shape = 's32[2]{0}', space=sflag, size = 0x8, scoped, tag = 'scoped memory for tpu_custom_call.1']
    #allocation6 [shape = 'u8[65536]{0}', space=vmem, size = 0x10000, scoped, tag = 'input window, operand 1']
    #allocation7 [shape = 's32[2]{0}', space=sflag, size = 0x8, scoped, tag = 'scoped memory for tpu_custom_call.1']
    #allocation8 [shape = 'u8[65536]{0}', space=vmem, size = 0x10000, scoped, tag = 'output window, operand 0']
    %7 = vsyncpa [#allocation4], 0
    %s8 = scalar_lea.sflag [#allocation4], 1
    %9 = vsyncpa %s8, 0
    %10 = vsyncpa [#allocation7], 0
    %s11 = scalar_lea.sflag [#allocation7], 1
    %12 = vsyncpa %s11, 0
    %13 = vsyncpa [#allocation5], 0
    %s14 = scalar_lea.sflag [#allocation5], 1
    %15 = vsyncpa %s14, 0
    loop: start=0, step=1, limit=4
    $region2: #{tpu_custom_call.1} parent=1 // loop_pre_header
      _
    $region3: #{tpu_custom_call.1} parent=1 // loop_header
      %s17 = sphi 0, %s21
      %p18 = scmp.ge.s32.totalorder %s17, 4
      %s27 = sphi 0, %s29
      %s30 = sphi 0, %s27
      %s31 = sphi 0, %s30
      %s47 = sphi 0, %s31
      %s53 = sphi 0, %s55
      %s56 = sphi 0, %s53
      %s57 = sphi 0, %s56
      %s73 = sphi 0, %s57
      %s79 = sphi 0, %s81
      %s82 = sphi 0, %s79
      %s83 = sphi 0, %s82
      %s99 = sphi 0, %s83
    $region4: #{tpu_custom_call.1} parent=1 // loop_header_branch
      %20 = sbr.rel (%p18) target = $region8
    $region5: #{tpu_custom_call.1} parent=1 // loop_body
      %s22 = ssub.s32 %s17, 1
      %s23 = ssub.s32 %s17, 2
      %s24 = sadd.s32 %s17, 1
      %s25 = ssub.s32 %s17, %s24
      %p26 = scmp.eq.s32.totalorder %s25, 0
      %s28 = sadd.s32 %s27, 1
      %s29 = scalar_select %p26, %s27, %s28
      %p32 = pneg %p26
      %p33 = scmp.eq.s32.totalorder %s17, 1
      %p34 = por %p32, %p33
      %p35 = scmp.ne.s32.totalorder %s27, %s30
      %p36 = scmp.eq.s32.totalorder %s17, 0
      %p37 = por %p35, %p36
      %p38 = scmp.ne.s32.totalorder %s27, %s30
      %p39 = scmp.eq.s32.totalorder %s22, 1
      %p40 = por %p38, %p39
      %p41 = scmp.ne.s32.totalorder %s30, %s31
      %p42 = scmp.eq.s32.totalorder %s22, 0
      %p43 = por %p41, %p42
      %p44 = scmp.ne.s32.totalorder %s30, %s31
      %p45 = scmp.eq.s32.totalorder %s23, 1
      %p46 = por %p44, %p45
      %p48 = scmp.ne.s32.totalorder %s31, %s47
      %p49 = scmp.eq.s32.totalorder %s23, 0
      %p50 = por %p48, %p49
      %s51 = ssub.s32 %s17, %s24
      %p52 = scmp.eq.s32.totalorder %s51, 0
      %s54 = sadd.s32 %s53, 1
      %s55 = scalar_select %p52, %s53, %s54
      %p58 = pneg %p52
      %p59 = scmp.eq.s32.totalorder %s17, 1
      %p60 = por %p58, %p59
      %p61 = scmp.ne.s32.totalorder %s53, %s56
      %p62 = scmp.eq.s32.totalorder %s17, 0
      %p63 = por %p61, %p62
      %p64 = scmp.ne.s32.totalorder %s53, %s56
      %p65 = scmp.eq.s32.totalorder %s22, 1
      %p66 = por %p64, %p65
      %p67 = scmp.ne.s32.totalorder %s56, %s57
      %p68 = scmp.eq.s32.totalorder %s22, 0
      %p69 = por %p67, %p68
      %p70 = scmp.ne.s32.totalorder %s56, %s57
      %p71 = scmp.eq.s32.totalorder %s23, 1
      %p72 = por %p70, %p71
      %p74 = scmp.ne.s32.totalorder %s57, %s73
      %p75 = scmp.eq.s32.totalorder %s23, 0
      %p76 = por %p74, %p75
      %s77 = ssub.s32 %s17, %s24
      %p78 = scmp.eq.s32.totalorder %s77, 0
      %s80 = sadd.s32 %s79, 1
      %s81 = scalar_select %p78, %s79, %s80
      %p84 = pneg %p78
      %p85 = scmp.eq.s32.totalorder %s17, 1
      %p86 = por %p84, %p85
      %p87 = scmp.ne.s32.totalorder %s79, %s82
      %p88 = scmp.eq.s32.totalorder %s17, 0
      %p89 = por %p87, %p88
      %p90 = scmp.ne.s32.totalorder %s79, %s82
      %p91 = scmp.eq.s32.totalorder %s22, 1
      %p92 = por %p90, %p91
      %p93 = scmp.ne.s32.totalorder %s82, %s83
      %p94 = scmp.eq.s32.totalorder %s22, 0
      %p95 = por %p93, %p94
      %p96 = scmp.ne.s32.totalorder %s82, %s83
      %p97 = scmp.eq.s32.totalorder %s23, 1
      %p98 = por %p96, %p97
      %p100 = scmp.ne.s32.totalorder %s83, %s99
      %p101 = scmp.eq.s32.totalorder %s23, 0
      %p102 = por %p100, %p101
      %p103 = scmp.le.s32.totalorder 1, %s17
      %p104 = scmp.lt.s32.totalorder %s17, 3
      %p105 = pnand %p103, %p104
      %p106 = pneg %p105
      // Predicated region
      $region9: #{tpu_custom_call.1} parent=5 // pred_check
        _
      $region10: #{tpu_custom_call.1} parent=5 // pred_check_branch
        %108 = sbr.rel (%p105) target = $region12
      $region11: #{tpu_custom_call.1} parent=5 // pred_region
        %s109 = ssub.s32 %s17, 1
      $region12: #{tpu_custom_call.1} parent=5 // pred_fallthru
        _
      %p110 = scmp.lt.s32.totalorder %s17, 2
      // Predicated region
      $region13: #{tpu_custom_call.1} parent=5 // pred_check
        %p111 = pneg %p110
      $region14: #{tpu_custom_call.1} parent=5 // pred_check_branch
        %113 = sbr.rel (%p111) target = $region16
      $region15: #{tpu_custom_call.1} parent=5 // pred_region
        // Predicated region
        $region17: #{tpu_custom_call.1} parent=15 // pred_check
          %p114 = pneg %p37
        $region18: #{tpu_custom_call.1} parent=15 // pred_check_branch
          %116 = sbr.rel (%p114) target = $region20
        $region19: #{tpu_custom_call.1} parent=15 // pred_region
          %s117 = sand.u32 %s27, 1
          %s118 = scalar_lea.sflag [#allocation4], %s117
          %s119 = sand.u32 %s27, 1
          %s120 = smul.addr %s119, 4
          %s121 = scalar_lea.vmem [#allocation3], %s120
          %s122 = smul.u32 4, %s17
          %s124 = ssub.s32 64, 64
          %125 = vsyncadd %s118, %s124
          %s126 = smul.addr %s122, 16
          %s127 = scalar_lea.hbm %s0, %s126
          %s128 = sshll.u32 %s121, 4
          %s129 = int_to_ptr.vmem [resolvable:$true] %s128
          %134 = dma.hbm_to_vmem [thread:$0]  %s127, 64, %s129, %s118, 16, 16, 1
        $region20: #{tpu_custom_call.1} parent=15 // pred_fallthru
          _
        // Predicated region
        $region21: #{tpu_custom_call.1} parent=15 // pred_check
          %p135 = pneg %p63
        $region22: #{tpu_custom_call.1} parent=15 // pred_check_branch
          %137 = sbr.rel (%p135) target = $region24
        $region23: #{tpu_custom_call.1} parent=15 // pred_region
          %s138 = sand.u32 %s53, 1
          %s139 = scalar_lea.sflag [#allocation7], %s138
          %s140 = sand.u32 %s53, 1
          %s141 = smul.addr %s140, 64
          %s142 = scalar_lea.vmem [#allocation6], %s141
          %s143 = smul.u32 4, %s17
          %s145 = ssub.s32 1024, 1024
          %146 = vsyncadd %s139, %s145
          %s147 = smul.addr %s143, 2
          %s148 = smul.addr %s147, 128
          %s149 = scalar_lea.hbm %s1, %s148
          %s150 = sshll.u32 %s142, 4
          %s151 = int_to_ptr.vmem [resolvable:$true] %s150
          %156 = dma.hbm_to_vmem [thread:$0]  %s149, 1024, %s151, %s139, 128, 128, 8
        $region24: #{tpu_custom_call.1} parent=15 // pred_fallthru
          _
      $region16: #{tpu_custom_call.1} parent=5 // pred_fallthru
        _
      %p157 = scmp.le.s32.totalorder 1, %s17
      %p158 = scmp.lt.s32.totalorder %s17, 3
      %p159 = pnand %p157, %p158
      %p160 = pneg %p159
      // Predicated region
      $region25: #{tpu_custom_call.1} parent=5 // pred_check
        _
      $region26: #{tpu_custom_call.1} parent=5 // pred_check_branch
        %162 = sbr.rel (%p159) target = $region28
      $region27: #{tpu_custom_call.1} parent=5 // pred_region
        %s163 = ssub.s32 %s17, 1
        %s164 = sand.u32 %s30, 1
        %s165 = scalar_lea.sflag [#allocation4], %s164
        %s166 = sand.u32 %s30, 1
        %s167 = smul.addr %s166, 4
        %s168 = scalar_lea.vmem [#allocation3], %s167
        // Predicated region
        $region29: #{tpu_custom_call.1} parent=27 // pred_check
          %p169 = pneg %p43
        $region30: #{tpu_custom_call.1} parent=27 // pred_check_branch
          %171 = sbr.rel (%p169) target = $region32
        $region31: #{tpu_custom_call.1} parent=27 // pred_region
          %172 = dma.done %s165, 64
        $region32: #{tpu_custom_call.1} parent=27 // pred_fallthru
          _
        %s173 = sand.u32 %s56, 1
        %s174 = scalar_lea.sflag [#allocation7], %s173
        %s175 = sand.u32 %s56, 1
        %s176 = smul.addr %s175, 64
        %s177 = scalar_lea.vmem [#allocation6], %s176
        // Predicated region
        $region33: #{tpu_custom_call.1} parent=27 // pred_check
          %p178 = pneg %p69
        $region34: #{tpu_custom_call.1} parent=27 // pred_check_branch
          %180 = sbr.rel (%p178) target = $region36
        $region35: #{tpu_custom_call.1} parent=27 // pred_region
          %181 = dma.done %s174, 1024
        $region36: #{tpu_custom_call.1} parent=27 // pred_fallthru
          _
        %s182 = sand.u32 %s30, 1
        %s183 = scalar_lea.sflag [#allocation4], %s182
        %s184 = sand.u32 %s30, 1
        %s185 = smul.addr %s184, 4
        %s186 = scalar_lea.vmem [#allocation3], %s185
        %p187 = pneg %p43
        %p188 = pneg %p40
        %s189 = sand.u32 %s56, 1
        %s190 = scalar_lea.sflag [#allocation7], %s189
        %s191 = sand.u32 %s56, 1
        %s192 = smul.addr %s191, 64
        %s193 = scalar_lea.vmem [#allocation6], %s192
        %p194 = pneg %p69
        %p195 = pneg %p66
        %p196 = pneg %p95
        %p197 = pneg %p92
        %s198 = sand.u32 %s82, 1
        %s199 = scalar_lea.sflag [#allocation5], %s198
        %s200 = sand.u32 %s82, 1
        %s201 = smul.addr %s200, 64
        %s202 = scalar_lea.vmem [#allocation8], %s201
        %s203 = smul.u32 4, %s22
        %s204 = smul.u32 4, %s22
        %s205 = smul.u32 4, %s22
        %v206 = vld [vmem:[%s177] sm:$0xff]
        %v207 = vld [vmem:[%s177 + $0x8] sm:$0xff]
        %v208 = vld [vmem:[%s177 + $0x10] sm:$0xff]
        %v209 = vld [vmem:[%s177 + $0x18] sm:$0xff]
        %v210 = vld [vmem:[%s177 + $0x20] sm:$0xff]
        %v211 = vld [vmem:[%s177 + $0x28] sm:$0xff]
        %v212 = vld [vmem:[%s177 + $0x30] sm:$0xff]
        %v213 = vld [vmem:[%s177 + $0x38] sm:$0xff]
        %vm214 = vcmask 139264
        %215 = vst.msk [vmem:[#allocation2] sm:$0x1] %vm214, 0.0
        %216 = vst.msk [vmem:[#allocation2 + $0x18] sm:$0x1] %vm214, 0.0
        %217 = vst.msk [vmem:[#allocation2 + $0x30] sm:$0x1] %vm214, 0.0
        %218 = vst.msk [vmem:[#allocation2 + $0x48] sm:$0x1] %vm214, 0.0
        %219 = vst.msk [vmem:[#allocation2 + $0x11] sm:$0x1] %vm214, 0.0
        %220 = vst.msk [vmem:[#allocation2 + $0x29] sm:$0x1] %vm214, 0.0
        %221 = vst.msk [vmem:[#allocation2 + $0x41] sm:$0x1] %vm214, 0.0
        %222 = vst.msk [vmem:[#allocation2 + $0x59] sm:$0x1] %vm214, 0.0
        %vm223 = vcmask 7168
        %224 = vst.msk [vmem:[#allocation2 + $0x1] sm:$0xff] %vm223, 0.0
        %225 = vst.msk [vmem:[#allocation2 + $0x9] sm:$0xff] %vm223, 0.0
        %226 = vst.msk [vmem:[#allocation2 + $0x19] sm:$0xff] %vm223, 0.0
        %227 = vst.msk [vmem:[#allocation2 + $0x21] sm:$0xff] %vm223, 0.0
        %228 = vst.msk [vmem:[#allocation2 + $0x31] sm:$0xff] %vm223, 0.0
        %229 = vst.msk [vmem:[#allocation2 + $0x39] sm:$0xff] %vm223, 0.0
        %230 = vst.msk [vmem:[#allocation2 + $0x49] sm:$0xff] %vm223, 0.0
        %231 = vst.msk [vmem:[#allocation2 + $0x51] sm:$0xff] %vm223, 0.0
        %vm232 = vcmask 146568
        %233 = vst.msk [vmem:[#allocation2 + $0x1] sm:$0xff] %vm232, 0.0
        %234 = vst.msk [vmem:[#allocation2 + $0x9] sm:$0xff] %vm232, 0.0
        %235 = vst.msk [vmem:[#allocation2 + $0x19] sm:$0xff] %vm232, 0.0
        %236 = vst.msk [vmem:[#allocation2 + $0x21] sm:$0xff] %vm232, 0.0
        %237 = vst.msk [vmem:[#allocation2 + $0x31] sm:$0xff] %vm232, 0.0
        %238 = vst.msk [vmem:[#allocation2 + $0x39] sm:$0xff] %vm232, 0.0
        %239 = vst.msk [vmem:[#allocation2 + $0x49] sm:$0xff] %vm232, 0.0
        %240 = vst.msk [vmem:[#allocation2 + $0x51] sm:$0xff] %vm232, 0.0
        %249 = vrot.lane.b32.xlu0 %v206, 1
        %v250 = vpop.permute.xlu0 %249
        %251 = vrot.lane.b32.xlu0 %v207, 1
        %v252 = vpop.permute.xlu0 %251
        %253 = vrot.lane.b32.xlu0 %v208, 1
        %v254 = vpop.permute.xlu0 %253
        %255 = vrot.lane.b32.xlu0 %v209, 1
        %v256 = vpop.permute.xlu0 %255
        %257 = vrot.lane.b32.xlu0 %v210, 1
        %v258 = vpop.permute.xlu0 %257
        %259 = vrot.lane.b32.xlu0 %v211, 1
        %v260 = vpop.permute.xlu0 %259
        %261 = vrot.lane.b32.xlu0 %v212, 1
        %v262 = vpop.permute.xlu0 %261
        %263 = vrot.lane.b32.xlu0 %v213, 1
        %v264 = vpop.permute.xlu0 %263
        %vm273 = vcmask 138248
        %274 = vst.msk [vmem:[#allocation2 + $0x1] sm:$0xff] %vm273, %v250
        %275 = vst.msk [vmem:[#allocation2 + $0x9] sm:$0xff] %vm273, %v252
        %276 = vst.msk [vmem:[#allocation2 + $0x19] sm:$0xff] %vm273, %v254
        %277 = vst.msk [vmem:[#allocation2 + $0x21] sm:$0xff] %vm273, %v256
        %278 = vst.msk [vmem:[#allocation2 + $0x31] sm:$0xff] %vm273, %v258
        %279 = vst.msk [vmem:[#allocation2 + $0x39] sm:$0xff] %vm273, %v260
        %280 = vst.msk [vmem:[#allocation2 + $0x49] sm:$0xff] %vm273, %v262
        %281 = vst.msk [vmem:[#allocation2 + $0x51] sm:$0xff] %vm273, %v264
        %v282 = vld [vmem:[%s168] sm:$0x1]
        %v283 = vld [vmem:[%s168 + $0x1] sm:$0x1]
        %v284 = vld [vmem:[%s168 + $0x2] sm:$0x1]
        %v285 = vld [vmem:[%s168 + $0x3] sm:$0x1]
        %v286 = vld [vmem:[#allocation2] sm:$0xff]
        %v287 = vld [vmem:[#allocation2 + $0x8] sm:$0xff]
        %v288 = vld [vmem:[#allocation2 + $0x18] sm:$0xff]
        %v289 = vld [vmem:[#allocation2 + $0x20] sm:$0xff]
        %v290 = vld [vmem:[#allocation2 + $0x30] sm:$0xff]
        %v291 = vld [vmem:[#allocation2 + $0x38] sm:$0xff]
        %v292 = vld [vmem:[#allocation2 + $0x48] sm:$0xff]
        %v293 = vld [vmem:[#allocation2 + $0x50] sm:$0xff]
        %v298 = vlaneseq
        %v299 = vshrl.u32 %v298, 7
        %v300 = vsub.s32 0, %v299
        %v301 = vrot.slane %v282, %v300
        %v302 = vlaneseq
        %v303 = vshrl.u32 %v302, 7
        %v304 = vsub.s32 0, %v303
        %v305 = vrot.slane %v283, %v304
        %v306 = vlaneseq
        %v307 = vshrl.u32 %v306, 7
        %v308 = vsub.s32 0, %v307
        %v309 = vrot.slane %v284, %v308
        %v310 = vlaneseq
        %v311 = vshrl.u32 %v310, 7
        %v312 = vsub.s32 0, %v311
        %v313 = vrot.slane %v285, %v312
        %314 = vset.pattern.permute.xlu0 0
        %315 = vperm.xlu0 %314, %v301
        %v316 = vpop.permute.xlu0 %315
        %318 = vset.pattern.permute.xlu0 0
        %319 = vperm.xlu0 %318, %v305
        %v320 = vpop.permute.xlu0 %319
        %322 = vset.pattern.permute.xlu0 0
        %323 = vperm.xlu0 %322, %v309
        %v324 = vpop.permute.xlu0 %323
        %326 = vset.pattern.permute.xlu0 0
        %327 = vperm.xlu0 %326, %v313
        %v328 = vpop.permute.xlu0 %327
        %v330 = vmul.f32 %v316, %v286
        %v331 = vmul.f32 %v316, %v287
        %v332 = vmul.f32 %v320, %v288
        %v333 = vmul.f32 %v320, %v289
        %v334 = vmul.f32 %v324, %v290
        %v335 = vmul.f32 %v324, %v291
        %v336 = vmul.f32 %v328, %v292
        %v337 = vmul.f32 %v328, %v293
        %338 = vset.pattern.permute.xlu0 1
        %339 = vperm.xlu0 %338, %v301
        %v340 = vpop.permute.xlu0 %339
        %342 = vset.pattern.permute.xlu0 1
        %343 = vperm.xlu0 %342, %v305
        %v344 = vpop.permute.xlu0 %343
        %346 = vset.pattern.permute.xlu0 1
        %347 = vperm.xlu0 %346, %v309
        %v348 = vpop.permute.xlu0 %347
        %350 = vset.pattern.permute.xlu0 1
        %351 = vperm.xlu0 %350, %v313
        %v352 = vpop.permute.xlu0 %351
        %v354 = vmul.f32 %v340, %v286
        %v355 = vmul.f32 %v340, %v287
        %v356 = vmul.f32 %v344, %v288
        %v357 = vmul.f32 %v344, %v289
        %v358 = vmul.f32 %v348, %v290
        %v359 = vmul.f32 %v348, %v291
        %v360 = vmul.f32 %v352, %v292
        %v361 = vmul.f32 %v352, %v293
        %370 = vrot.lane.b32.xlu0 %v354, 127
        %v371 = vpop.permute.xlu0 %370
        %372 = vrot.lane.b32.xlu0 %v355, 127
        %v373 = vpop.permute.xlu0 %372
        %374 = vrot.lane.b32.xlu0 %v356, 127
        %v375 = vpop.permute.xlu0 %374
        %376 = vrot.lane.b32.xlu0 %v357, 127
        %v377 = vpop.permute.xlu0 %376
        %378 = vrot.lane.b32.xlu0 %v358, 127
        %v379 = vpop.permute.xlu0 %378
        %380 = vrot.lane.b32.xlu0 %v359, 127
        %v381 = vpop.permute.xlu0 %380
        %382 = vrot.lane.b32.xlu0 %v360, 127
        %v383 = vpop.permute.xlu0 %382
        %384 = vrot.lane.b32.xlu0 %v361, 127
        %v385 = vpop.permute.xlu0 %384
        %v394 = vadd.f32 %v330, %v371
        %v395 = vadd.f32 %v331, %v373
        %v396 = vadd.f32 %v332, %v375
        %v397 = vadd.f32 %v333, %v377
        %v398 = vadd.f32 %v334, %v379
        %v399 = vadd.f32 %v335, %v381
        %v400 = vadd.f32 %v336, %v383
        %v401 = vadd.f32 %v337, %v385
        %402 = vset.pattern.permute.xlu0 2
        %403 = vperm.xlu0 %402, %v301
        %v404 = vpop.permute.xlu0 %403
        %406 = vset.pattern.permute.xlu0 2
        %407 = vperm.xlu0 %406, %v305
        %v408 = vpop.permute.xlu0 %407
        %410 = vset.pattern.permute.xlu0 2
        %411 = vperm.xlu0 %410, %v309
        %v412 = vpop.permute.xlu0 %411
        %414 = vset.pattern.permute.xlu0 2
        %415 = vperm.xlu0 %414, %v313
        %v416 = vpop.permute.xlu0 %415
        %v418 = vmul.f32 %v404, %v286
        %v419 = vmul.f32 %v404, %v287
        %v420 = vmul.f32 %v408, %v288
        %v421 = vmul.f32 %v408, %v289
        %v422 = vmul.f32 %v412, %v290
        %v423 = vmul.f32 %v412, %v291
        %v424 = vmul.f32 %v416, %v292
        %v425 = vmul.f32 %v416, %v293
        %434 = vrot.lane.b32.xlu0 %v418, 126
        %v435 = vpop.permute.xlu0 %434
        %436 = vrot.lane.b32.xlu0 %v419, 126
        %v437 = vpop.permute.xlu0 %436
        %438 = vrot.lane.b32.xlu0 %v420, 126
        %v439 = vpop.permute.xlu0 %438
        %440 = vrot.lane.b32.xlu0 %v421, 126
        %v441 = vpop.permute.xlu0 %440
        %442 = vrot.lane.b32.xlu0 %v422, 126
        %v443 = vpop.permute.xlu0 %442
        %444 = vrot.lane.b32.xlu0 %v423, 126
        %v445 = vpop.permute.xlu0 %444
        %446 = vrot.lane.b32.xlu0 %v424, 126
        %v447 = vpop.permute.xlu0 %446
        %448 = vrot.lane.b32.xlu0 %v425, 126
        %v449 = vpop.permute.xlu0 %448
        %v458 = vadd.f32 %v394, %v435
        %v459 = vadd.f32 %v395, %v437
        %v460 = vadd.f32 %v396, %v439
        %v461 = vadd.f32 %v397, %v441
        %v462 = vadd.f32 %v398, %v443
        %v463 = vadd.f32 %v399, %v445
        %v464 = vadd.f32 %v400, %v447
        %v465 = vadd.f32 %v401, %v449
        %v466 = vld [vmem:[#allocation2 + $0x1] sm:$0xff]
        %v467 = vld [vmem:[#allocation2 + $0x9] sm:$0xff]
        %v468 = vld [vmem:[#allocation2 + $0x19] sm:$0xff]
        %v469 = vld [vmem:[#allocation2 + $0x21] sm:$0xff]
        %v470 = vld [vmem:[#allocation2 + $0x31] sm:$0xff]
        %v471 = vld [vmem:[#allocation2 + $0x39] sm:$0xff]
        %v472 = vld [vmem:[#allocation2 + $0x49] sm:$0xff]
        %v473 = vld [vmem:[#allocation2 + $0x51] sm:$0xff]
        %474 = vset.pattern.permute.xlu0 3
        %475 = vperm.xlu0 %474, %v301
        %v476 = vpop.permute.xlu0 %475
        %478 = vset.pattern.permute.xlu0 3
        %479 = vperm.xlu0 %478, %v305
        %v480 = vpop.permute.xlu0 %479
        %482 = vset.pattern.permute.xlu0 3
        %483 = vperm.xlu0 %482, %v309
        %v484 = vpop.permute.xlu0 %483
        %486 = vset.pattern.permute.xlu0 3
        %487 = vperm.xlu0 %486, %v313
        %v488 = vpop.permute.xlu0 %487
        %v490 = vmul.f32 %v476, %v466
        %v491 = vmul.f32 %v476, %v467
        %v492 = vmul.f32 %v480, %v468
        %v493 = vmul.f32 %v480, %v469
        %v494 = vmul.f32 %v484, %v470
        %v495 = vmul.f32 %v484, %v471
        %v496 = vmul.f32 %v488, %v472
        %v497 = vmul.f32 %v488, %v473
        %v498 = vadd.f32 %v458, %v490
        %v499 = vadd.f32 %v459, %v491
        %v500 = vadd.f32 %v460, %v492
        %v501 = vadd.f32 %v461, %v493
        %v502 = vadd.f32 %v462, %v494
        %v503 = vadd.f32 %v463, %v495
        %v504 = vadd.f32 %v464, %v496
        %v505 = vadd.f32 %v465, %v497
        %506 = vset.pattern.permute.xlu0 4
        %507 = vperm.xlu0 %506, %v301
        %v508 = vpop.permute.xlu0 %507
        %510 = vset.pattern.permute.xlu0 4
        %511 = vperm.xlu0 %510, %v305
        %v512 = vpop.permute.xlu0 %511
        %514 = vset.pattern.permute.xlu0 4
        %515 = vperm.xlu0 %514, %v309
        %v516 = vpop.permute.xlu0 %515
        %518 = vset.pattern.permute.xlu0 4
        %519 = vperm.xlu0 %518, %v313
        %v520 = vpop.permute.xlu0 %519
        %v522 = vmul.f32 %v508, %v466
        %v523 = vmul.f32 %v508, %v467
        %v524 = vmul.f32 %v512, %v468
        %v525 = vmul.f32 %v512, %v469
        %v526 = vmul.f32 %v516, %v470
        %v527 = vmul.f32 %v516, %v471
        %v528 = vmul.f32 %v520, %v472
        %v529 = vmul.f32 %v520, %v473
        %538 = vrot.lane.b32.xlu0 %v522, 127
        %v539 = vpop.permute.xlu0 %538
        %540 = vrot.lane.b32.xlu0 %v523, 127
        %v541 = vpop.permute.xlu0 %540
        %542 = vrot.lane.b32.xlu0 %v524, 127
        %v543 = vpop.permute.xlu0 %542
        %544 = vrot.lane.b32.xlu0 %v525, 127
        %v545 = vpop.permute.xlu0 %544
        %546 = vrot.lane.b32.xlu0 %v526, 127
        %v547 = vpop.permute.xlu0 %546
        %548 = vrot.lane.b32.xlu0 %v527, 127
        %v549 = vpop.permute.xlu0 %548
        %550 = vrot.lane.b32.xlu0 %v528, 127
        %v551 = vpop.permute.xlu0 %550
        %552 = vrot.lane.b32.xlu0 %v529, 127
        %v553 = vpop.permute.xlu0 %552
        %v562 = vadd.f32 %v498, %v539
        %v563 = vadd.f32 %v499, %v541
        %v564 = vadd.f32 %v500, %v543
        %v565 = vadd.f32 %v501, %v545
        %v566 = vadd.f32 %v502, %v547
        %v567 = vadd.f32 %v503, %v549
        %v568 = vadd.f32 %v504, %v551
        %v569 = vadd.f32 %v505, %v553
        %570 = vset.pattern.permute.xlu0 5
        %571 = vperm.xlu0 %570, %v301
        %v572 = vpop.permute.xlu0 %571
        %574 = vset.pattern.permute.xlu0 5
        %575 = vperm.xlu0 %574, %v305
        %v576 = vpop.permute.xlu0 %575
        %578 = vset.pattern.permute.xlu0 5
        %579 = vperm.xlu0 %578, %v309
        %v580 = vpop.permute.xlu0 %579
        %582 = vset.pattern.permute.xlu0 5
        %583 = vperm.xlu0 %582, %v313
        %v584 = vpop.permute.xlu0 %583
        %v586 = vmul.f32 %v572, %v466
        %v587 = vmul.f32 %v572, %v467
        %v588 = vmul.f32 %v576, %v468
        %v589 = vmul.f32 %v576, %v469
        %v590 = vmul.f32 %v580, %v470
        %v591 = vmul.f32 %v580, %v471
        %v592 = vmul.f32 %v584, %v472
        %v593 = vmul.f32 %v584, %v473
        %602 = vrot.lane.b32.xlu0 %v586, 126
        %v603 = vpop.permute.xlu0 %602
        %604 = vrot.lane.b32.xlu0 %v587, 126
        %v605 = vpop.permute.xlu0 %604
        %606 = vrot.lane.b32.xlu0 %v588, 126
        %v607 = vpop.permute.xlu0 %606
        %608 = vrot.lane.b32.xlu0 %v589, 126
        %v609 = vpop.permute.xlu0 %608
        %610 = vrot.lane.b32.xlu0 %v590, 126
        %v611 = vpop.permute.xlu0 %610
        %612 = vrot.lane.b32.xlu0 %v591, 126
        %v613 = vpop.permute.xlu0 %612
        %614 = vrot.lane.b32.xlu0 %v592, 126
        %v615 = vpop.permute.xlu0 %614
        %616 = vrot.lane.b32.xlu0 %v593, 126
        %v617 = vpop.permute.xlu0 %616
        %v626 = vadd.f32 %v562, %v603
        %v627 = vadd.f32 %v563, %v605
        %v628 = vadd.f32 %v564, %v607
        %v629 = vadd.f32 %v565, %v609
        %v630 = vadd.f32 %v566, %v611
        %v631 = vadd.f32 %v567, %v613
        %v632 = vadd.f32 %v568, %v615
        %v633 = vadd.f32 %v569, %v617
        %v634 = vld [vmem:[#allocation2 + $0x2] sm:$0xff]
        %v635 = vld [vmem:[#allocation2 + $0xa] sm:$0xff]
        %v636 = vld [vmem:[#allocation2 + $0x1a] sm:$0xff]
        %v637 = vld [vmem:[#allocation2 + $0x22] sm:$0xff]
        %v638 = vld [vmem:[#allocation2 + $0x32] sm:$0xff]
        %v639 = vld [vmem:[#allocation2 + $0x3a] sm:$0xff]
        %v640 = vld [vmem:[#allocation2 + $0x4a] sm:$0xff]
        %v641 = vld [vmem:[#allocation2 + $0x52] sm:$0xff]
        %642 = vset.pattern.permute.xlu0 6
        %643 = vperm.xlu0 %642, %v301
        %v644 = vpop.permute.xlu0 %643
        %646 = vset.pattern.permute.xlu0 6
        %647 = vperm.xlu0 %646, %v305
        %v648 = vpop.permute.xlu0 %647
        %650 = vset.pattern.permute.xlu0 6
        %651 = vperm.xlu0 %650, %v309
        %v652 = vpop.permute.xlu0 %651
        %654 = vset.pattern.permute.xlu0 6
        %655 = vperm.xlu0 %654, %v313
        %v656 = vpop.permute.xlu0 %655
        %v658 = vmul.f32 %v644, %v634
        %v659 = vmul.f32 %v644, %v635
        %v660 = vmul.f32 %v648, %v636
        %v661 = vmul.f32 %v648, %v637
        %v662 = vmul.f32 %v652, %v638
        %v663 = vmul.f32 %v652, %v639
        %v664 = vmul.f32 %v656, %v640
        %v665 = vmul.f32 %v656, %v641
        %v666 = vadd.f32 %v626, %v658
        %v667 = vadd.f32 %v627, %v659
        %v668 = vadd.f32 %v628, %v660
        %v669 = vadd.f32 %v629, %v661
        %v670 = vadd.f32 %v630, %v662
        %v671 = vadd.f32 %v631, %v663
        %v672 = vadd.f32 %v632, %v664
        %v673 = vadd.f32 %v633, %v665
        %674 = vset.pattern.permute.xlu0 7
        %675 = vperm.xlu0 %674, %v301
        %v676 = vpop.permute.xlu0 %675
        %678 = vset.pattern.permute.xlu0 7
        %679 = vperm.xlu0 %678, %v305
        %v680 = vpop.permute.xlu0 %679
        %682 = vset.pattern.permute.xlu0 7
        %683 = vperm.xlu0 %682, %v309
        %v684 = vpop.permute.xlu0 %683
        %686 = vset.pattern.permute.xlu0 7
        %687 = vperm.xlu0 %686, %v313
        %v688 = vpop.permute.xlu0 %687
        %v690 = vmul.f32 %v676, %v634
        %v691 = vmul.f32 %v676, %v635
        %v692 = vmul.f32 %v680, %v636
        %v693 = vmul.f32 %v680, %v637
        %v694 = vmul.f32 %v684, %v638
        %v695 = vmul.f32 %v684, %v639
        %v696 = vmul.f32 %v688, %v640
        %v697 = vmul.f32 %v688, %v641
        %706 = vrot.lane.b32.xlu0 %v690, 127
        %v707 = vpop.permute.xlu0 %706
        %708 = vrot.lane.b32.xlu0 %v691, 127
        %v709 = vpop.permute.xlu0 %708
        %710 = vrot.lane.b32.xlu0 %v692, 127
        %v711 = vpop.permute.xlu0 %710
        %712 = vrot.lane.b32.xlu0 %v693, 127
        %v713 = vpop.permute.xlu0 %712
        %714 = vrot.lane.b32.xlu0 %v694, 127
        %v715 = vpop.permute.xlu0 %714
        %716 = vrot.lane.b32.xlu0 %v695, 127
        %v717 = vpop.permute.xlu0 %716
        %718 = vrot.lane.b32.xlu0 %v696, 127
        %v719 = vpop.permute.xlu0 %718
        %720 = vrot.lane.b32.xlu0 %v697, 127
        %v721 = vpop.permute.xlu0 %720
        %v730 = vadd.f32 %v666, %v707
        %v731 = vadd.f32 %v667, %v709
        %v732 = vadd.f32 %v668, %v711
        %v733 = vadd.f32 %v669, %v713
        %v734 = vadd.f32 %v670, %v715
        %v735 = vadd.f32 %v671, %v717
        %v736 = vadd.f32 %v672, %v719
        %v737 = vadd.f32 %v673, %v721
        %738 = vset.pattern.permute.xlu0 8
        %739 = vperm.xlu0 %738, %v301
        %v740 = vpop.permute.xlu0 %739
        %742 = vset.pattern.permute.xlu0 8
        %743 = vperm.xlu0 %742, %v305
        %v744 = vpop.permute.xlu0 %743
        %746 = vset.pattern.permute.xlu0 8
        %747 = vperm.xlu0 %746, %v309
        %v748 = vpop.permute.xlu0 %747
        %750 = vset.pattern.permute.xlu0 8
        %751 = vperm.xlu0 %750, %v313
        %v752 = vpop.permute.xlu0 %751
        %v754 = vmul.f32 %v740, %v634
        %v755 = vmul.f32 %v740, %v635
        %v756 = vmul.f32 %v744, %v636
        %v757 = vmul.f32 %v744, %v637
        %v758 = vmul.f32 %v748, %v638
        %v759 = vmul.f32 %v748, %v639
        %v760 = vmul.f32 %v752, %v640
        %v761 = vmul.f32 %v752, %v641
        %770 = vrot.lane.b32.xlu0 %v754, 126
        %v771 = vpop.permute.xlu0 %770
        %772 = vrot.lane.b32.xlu0 %v755, 126
        %v773 = vpop.permute.xlu0 %772
        %774 = vrot.lane.b32.xlu0 %v756, 126
        %v775 = vpop.permute.xlu0 %774
        %776 = vrot.lane.b32.xlu0 %v757, 126
        %v777 = vpop.permute.xlu0 %776
        %778 = vrot.lane.b32.xlu0 %v758, 126
        %v779 = vpop.permute.xlu0 %778
        %780 = vrot.lane.b32.xlu0 %v759, 126
        %v781 = vpop.permute.xlu0 %780
        %782 = vrot.lane.b32.xlu0 %v760, 126
        %v783 = vpop.permute.xlu0 %782
        %784 = vrot.lane.b32.xlu0 %v761, 126
        %v785 = vpop.permute.xlu0 %784
        %v794 = vadd.f32 %v730, %v771
        %v795 = vadd.f32 %v731, %v773
        %v796 = vadd.f32 %v732, %v775
        %v797 = vadd.f32 %v733, %v777
        %v798 = vadd.f32 %v734, %v779
        %v799 = vadd.f32 %v735, %v781
        %v800 = vadd.f32 %v736, %v783
        %v801 = vadd.f32 %v737, %v785
        %vm802 = vcmask 130048
        %803 = vst.msk [vmem:[%s202] sm:$0xff] %vm802, %v794
        %804 = vst.msk [vmem:[%s202 + $0x8] sm:$0xff] %vm802, %v795
        %805 = vst.msk [vmem:[%s202 + $0x10] sm:$0xff] %vm802, %v796
        %806 = vst.msk [vmem:[%s202 + $0x18] sm:$0xff] %vm802, %v797
        %807 = vst.msk [vmem:[%s202 + $0x20] sm:$0xff] %vm802, %v798
        %808 = vst.msk [vmem:[%s202 + $0x28] sm:$0xff] %vm802, %v799
        %809 = vst.msk [vmem:[%s202 + $0x30] sm:$0xff] %vm802, %v800
        %810 = vst.msk [vmem:[%s202 + $0x38] sm:$0xff] %vm802, %v801
        %s811 = sand.u32 %s82, 1
        %s812 = scalar_lea.sflag [#allocation5], %s811
        %s813 = sand.u32 %s82, 1
        %s814 = smul.addr %s813, 64
        %s815 = scalar_lea.vmem [#allocation8], %s814
        // Predicated region
        $region37: #{tpu_custom_call.1} parent=27 // pred_check
          %p816 = pneg %p92
        $region38: #{tpu_custom_call.1} parent=27 // pred_check_branch
          %818 = sbr.rel (%p816) target = $region40
        $region39: #{tpu_custom_call.1} parent=27 // pred_region
          %s819 = smul.u32 4, %s22
          %s821 = ssub.s32 1024, 1024
          %822 = vsyncadd %s812, %s821
          %s823 = smul.addr %s819, 2
          %s824 = smul.addr %s823, 128
          %s825 = scalar_lea.hbm %s2, %s824
          %s826 = sshll.u32 %s815, 4
          %s827 = int_to_ptr.vmem [resolvable:$true] %s826
          %832 = dma.vmem_to_hbm [thread:$0]  %s827, 1024, %s825, %s812, 128, 128, 8
        $region40: #{tpu_custom_call.1} parent=27 // pred_fallthru
          _
      $region28: #{tpu_custom_call.1} parent=5 // pred_fallthru
        _
      %p833 = scmp.le.s32.totalorder 2, %s17
      // Predicated region
      $region41: #{tpu_custom_call.1} parent=5 // pred_check
        %p834 = pneg %p833
      $region42: #{tpu_custom_call.1} parent=5 // pred_check_branch
        %836 = sbr.rel (%p834) target = $region44
      $region43: #{tpu_custom_call.1} parent=5 // pred_region
        %s837 = ssub.s32 %s17, 2
        // Predicated region
        $region45: #{tpu_custom_call.1} parent=43 // pred_check
          %p838 = pneg %p98
        $region46: #{tpu_custom_call.1} parent=43 // pred_check_branch
          %840 = sbr.rel (%p838) target = $region48
        $region47: #{tpu_custom_call.1} parent=43 // pred_region
          %s841 = sand.u32 %s83, 1
          %s842 = scalar_lea.sflag [#allocation5], %s841
          %s843 = sand.u32 %s83, 1
          %s844 = smul.addr %s843, 64
          %s845 = scalar_lea.vmem [#allocation8], %s844
          %846 = dma.done %s842, 1024
        $region48: #{tpu_custom_call.1} parent=43 // pred_fallthru
          _
      $region44: #{tpu_custom_call.1} parent=5 // pred_fallthru
        _
    $region6: #{tpu_custom_call.1} parent=1 // loop_footer
      %s21 = sadd.s32 1, %s17
    $region7: #{tpu_custom_call.1} parent=1 // loop_footer_branch
      %16 = sbr.rel target = $region3
    $region8: #{tpu_custom_call.1} parent=1 // loop_exit
      _
    %847 = vsyncpa [#allocation4], 1
    %s848 = scalar_lea.sflag [#allocation4], 1
    %849 = vsyncpa %s848, 1
    %850 = vsyncpa [#allocation7], 1
    %s851 = scalar_lea.sflag [#allocation7], 1
    %852 = vsyncpa %s851, 1
    %853 = vsyncpa [#allocation5], 1
    %s854 = scalar_lea.sflag [#allocation5], 1
    %855 = vsyncpa %s854, 1

</llo_original>
